<compile_context>
chip_gen: v7x
topology: tpu7x:2x2x1
jax: 0.10.0
libtpu: 0.0.40
codegen_flags: <defaults>
</compile_context>

<pallas_src>
import functools

import jax
import jax.numpy as jnp
from jax.experimental import pallas as pl
from jax.experimental.pallas import tpu as pltpu


# ---------------------------------------------------------------------------
# Module configuration (mirrors BNN.__init__)
# ---------------------------------------------------------------------------
NETWORK_SIZE = (4, 32, 16, 2)          # (din0, hidden..., dout_last)
LANE = 128                             # TPU lane width
SUBLANE = 8                            # TPU sublane height


def compute_no_params(network_size):
    no_params = 0
    for i in range(len(network_size) - 1):
        din, dout = network_size[i], network_size[i + 1]
        no_params += din * dout + dout
    return no_params


PARAM_DIM = compute_no_params(NETWORK_SIZE)


def _round_up(v, m):
    return ((v + m - 1) // m) * m


# ---------------------------------------------------------------------------
# Pallas kernel: one grid step carries ALL K samples; full MLP chain in VMEM.
# Layer 0 weights are stacked along the output dim, layers >= 1 are
# block-diagonal, so column block k of every activation is sample k's state.
# ---------------------------------------------------------------------------
def _bnn_forward_kernel(n_layers, x_ref, *refs):
    # refs = (w0_ref, b0_ref, w1_ref, b1_ref, ..., out_ref)
    out_ref = refs[-1]
    h = x_ref[...]                                   # (Np, din0) f32
    a = h
    for i in range(n_layers):
        w = refs[2 * i][...]                         # stacked / block-diag weight
        b = refs[2 * i + 1][...]                     # (1, width)
        a = jnp.dot(h, w, preferred_element_type=jnp.float32) + b
        if i < n_layers - 1:
            h = jnp.maximum(a, 0.0)                  # relu (act_function)
    out_ref[...] = a                                 # last pre-activation, lane-dense


def _pack_stacked_params(params, network_size, lane_pad):
    """Unpack flat (K, P) params into K-stacked / block-diagonal slabs.

    Runs under jit right next to the pallas_call, so XLA fuses the slicing,
    transposes and block-diag construction with the kernel launch.
    """
    K = params.shape[0]
    n_layers = len(network_size) - 1
    args = []
    start = 0
    for i in range(n_layers):
        din, dout = network_size[i], network_size[i + 1]
        w = params[:, start:start + din * dout].reshape(K, din, dout)
        start += din * dout
        b = params[:, start:start + dout]                      # (K, dout)
        start += dout
        if i == 0:
            # x is shared across samples: stack along the output (lane) dim.
            # (din, K*dout), column block k == W_k
            w_s = jnp.transpose(w, (1, 0, 2)).reshape(din, K * dout)
        else:
            # per-sample chain: block-diagonal (K*din, K*dout)
            eye = jnp.eye(K, dtype=params.dtype)
            w_s = (w[:, None, :, :] * eye[:, :, None, None]) \
                .transpose(0, 2, 1, 3).reshape(K * din, K * dout)
        b_s = b.reshape(1, K * dout)
        if i == n_layers - 1 and lane_pad > K * dout:
            # Pad the final stacked output width to a full lane multiple so the
            # kernel's HBM store is unmasked (lane-dense).
            w_s = jnp.pad(w_s, ((0, 0), (0, lane_pad - K * dout)))
            b_s = jnp.pad(b_s, ((0, 0), (0, lane_pad - K * dout)))
        args += [w_s, b_s]
    return args


@functools.partial(jax.jit, static_argnames=("network_size",))
def bnn_forward(params, x, network_size=NETWORK_SIZE):
    """Equivalent of BNN.forward(params, x).

    params: (K, param_dim) float32
    x:      (N, din0)      float32
    returns (K, N, dout_last) float32
    """
    K, P = params.shape
    N, d0 = x.shape
    n_layers = len(network_size) - 1
    d_last = network_size[-1]
    assert P == compute_no_params(network_size)
    assert d0 == network_size[0]

    out_width = K * d_last
    lane_pad = max(LANE, _round_up(out_width, LANE))

    # Pad rows to a sublane multiple (no-op at N=8).
    n_pad = max(SUBLANE, _round_up(N, SUBLANE))
    x_p = x if n_pad == N else jnp.pad(x, ((0, n_pad - N), (0, 0)))

    layer_args = _pack_stacked_params(params, network_size, lane_pad)

    in_specs = [pl.BlockSpec(x_p.shape, lambda k: (0, 0))]
    for arr in layer_args:
        in_specs.append(pl.BlockSpec(arr.shape, lambda k: (0, 0)))

    kernel = functools.partial(_bnn_forward_kernel, n_layers)

    out_flat = pl.pallas_call(
        kernel,
        out_shape=jax.ShapeDtypeStruct((n_pad, lane_pad), jnp.float32),
        grid=(1,),                                   # all K samples in one step
        in_specs=in_specs,
        out_specs=pl.BlockSpec((n_pad, lane_pad), lambda k: (0, 0)),
        compiler_params=pltpu.CompilerParams(
            dimension_semantics=("parallel",)),
    )(x_p, *layer_args)

    # Layout plumbing only: strip pads, recover (K, N, d_last).
    out = out_flat[:N, :out_width].reshape(N, K, d_last)
    return jnp.transpose(out, (1, 0, 2))


# ---------------------------------------------------------------------------
# Pure-JAX reference (direct transcription of the PyTorch forward)
# ---------------------------------------------------------------------------
def bnn_forward_ref(params, x, network_size=NETWORK_SIZE):
    K = params.shape[0]
    inputs = jnp.broadcast_to(x[None, :, :], (K,) + x.shape)
    start = 0
    a = inputs
    for i in range(len(network_size) - 1):
        din, dout = network_size[i], network_size[i + 1]
        wi = params[:, start:start + din * dout].reshape(K, din, dout)
        start += din * dout
        bi = params[:, start:start + dout][:, None, :]
        start += dout
        a = jnp.einsum('kio,kni->kno', wi, inputs) + bi
        inputs = jax.nn.relu(a)
    return a


# ---------------------------------------------------------------------------
# Main
# ---------------------------------------------------------------------------
if __name__ == "__main__":
    key = jax.random.PRNGKey(0)
    k_mean, k_eps, k_x = jax.random.split(key, 3)

    K = 2          # no_samples
    N = 8          # data points
    d0 = NETWORK_SIZE[0]

    # Deterministic "variational parameters" mirroring __init__:
    #   q_mean ~ Normal(0, 0.1), q_log_std = log(0.01)
    q_mean = 0.1 * jax.random.normal(k_mean, (PARAM_DIM,), dtype=jnp.float32)
    q_std = jnp.exp(jnp.log(jnp.float32(0.01))) * jnp.ones((PARAM_DIM,), jnp.float32)

    # get_posterior_samples_vi: rsample = mean + std * eps
    eps = jax.random.normal(k_eps, (K, PARAM_DIM), dtype=jnp.float32)
    params = q_mean[None, :] + q_std[None, :] * eps          # (K, param_dim)

    x = jax.random.normal(k_x, (N, d0), dtype=jnp.float32)   # (N, din0)

    out = bnn_forward(params, x)
    out = jax.block_until_ready(out)

    ref = bnn_forward_ref(params, x)
    assert out.shape == (K, N, NETWORK_SIZE[-1])
    assert jnp.allclose(out, ref, atol=1e-4, rtol=1e-4), "mismatch vs reference"

    print("KERNEL_OK")
</pallas_src>

<mosaic_0001>
module attributes {stable_mosaic.version = 11 : i64} {
  func.func @_bnn_forward_kernel(%arg0: i32, %arg1: memref<8x4xf32, #tpu.memory_space<vmem>>, %arg2: memref<4x64xf32, #tpu.memory_space<vmem>>, %arg3: memref<1x64xf32, #tpu.memory_space<vmem>>, %arg4: memref<64x32xf32, #tpu.memory_space<vmem>>, %arg5: memref<1x32xf32, #tpu.memory_space<vmem>>, %arg6: memref<32x128xf32, #tpu.memory_space<vmem>>, %arg7: memref<1x128xf32, #tpu.memory_space<vmem>>, %arg8: memref<8x128xf32, #tpu.memory_space<vmem>>) attributes {dimension_semantics = [#tpu.dimension_semantics<parallel>], iteration_bounds = array<i64: 1>, scalar_prefetch = 0 : i64, scratch_operands = 0 : i64, tpu.core_type = #tpu.core_type<tc>, window_params = [{pipeline_mode = #tpu.pipeline_mode<synchronous>, transform_indices = @transform_0, window_bounds = array<i64: 8, 4>}, {pipeline_mode = #tpu.pipeline_mode<synchronous>, transform_indices = @transform_1, window_bounds = array<i64: 4, 64>}, {pipeline_mode = #tpu.pipeline_mode<synchronous>, transform_indices = @transform_2, window_bounds = array<i64: 1, 64>}, {pipeline_mode = #tpu.pipeline_mode<synchronous>, transform_indices = @transform_3, window_bounds = array<i64: 64, 32>}, {pipeline_mode = #tpu.pipeline_mode<synchronous>, transform_indices = @transform_4, window_bounds = array<i64: 1, 32>}, {pipeline_mode = #tpu.pipeline_mode<synchronous>, transform_indices = @transform_5, window_bounds = array<i64: 32, 128>}, {pipeline_mode = #tpu.pipeline_mode<synchronous>, transform_indices = @transform_6, window_bounds = array<i64: 1, 128>}, {pipeline_mode = #tpu.pipeline_mode<synchronous>, transform_indices = @transform_7, window_bounds = array<i64: 8, 128>}]} {
    %c0 = arith.constant 0 : index
    %c0_0 = arith.constant 0 : index
    %0 = vector.load %arg1[%c0, %c0_0] : memref<8x4xf32, #tpu.memory_space<vmem>>, vector<8x4xf32>
    %c0_1 = arith.constant 0 : index
    %c0_2 = arith.constant 0 : index
    %1 = vector.load %arg2[%c0_1, %c0_2] : memref<4x64xf32, #tpu.memory_space<vmem>>, vector<4x64xf32>
    %c0_3 = arith.constant 0 : index
    %c0_4 = arith.constant 0 : index
    %2 = vector.load %arg3[%c0_3, %c0_4] : memref<1x64xf32, #tpu.memory_space<vmem>>, vector<1x64xf32>
    %cst = arith.constant dense<0.000000e+00> : vector<8x64xf32>
    %3 = tpu.matmul %0, %1, %cst {dimension_numbers = #tpu.dot_dimension_numbers<[1], [0], [0], [1], [0, 0, 1, 1], [], []>} : vector<8x4xf32>, vector<4x64xf32>, vector<8x64xf32> -> vector<8x64xf32>
    %4 = vector.broadcast %2 : vector<1x64xf32> to vector<8x64xf32>
    %5 = arith.addf %3, %4 : vector<8x64xf32>
    %cst_5 = arith.constant 0.000000e+00 : f32
    %6 = vector.broadcast %cst_5 : f32 to vector<8x64xf32>
    %7 = arith.maximumf %5, %6 : vector<8x64xf32>
    %c0_6 = arith.constant 0 : index
    %c0_7 = arith.constant 0 : index
    %8 = vector.load %arg4[%c0_6, %c0_7] : memref<64x32xf32, #tpu.memory_space<vmem>>, vector<64x32xf32>
    %c0_8 = arith.constant 0 : index
    %c0_9 = arith.constant 0 : index
    %9 = vector.load %arg5[%c0_8, %c0_9] : memref<1x32xf32, #tpu.memory_space<vmem>>, vector<1x32xf32>
    %cst_10 = arith.constant dense<0.000000e+00> : vector<8x32xf32>
    %10 = tpu.matmul %7, %8, %cst_10 {dimension_numbers = #tpu.dot_dimension_numbers<[1], [0], [0], [1], [0, 0, 1, 1], [], []>} : vector<8x64xf32>, vector<64x32xf32>, vector<8x32xf32> -> vector<8x32xf32>
    %11 = vector.broadcast %9 : vector<1x32xf32> to vector<8x32xf32>
    %12 = arith.addf %10, %11 : vector<8x32xf32>
    %cst_11 = arith.constant 0.000000e+00 : f32
    %13 = vector.broadcast %cst_11 : f32 to vector<8x32xf32>
    %14 = arith.maximumf %12, %13 : vector<8x32xf32>
    %c0_12 = arith.constant 0 : index
    %c0_13 = arith.constant 0 : index
    %15 = vector.load %arg6[%c0_12, %c0_13] : memref<32x128xf32, #tpu.memory_space<vmem>>, vector<32x128xf32>
    %c0_14 = arith.constant 0 : index
    %c0_15 = arith.constant 0 : index
    %16 = vector.load %arg7[%c0_14, %c0_15] : memref<1x128xf32, #tpu.memory_space<vmem>>, vector<1x128xf32>
    %cst_16 = arith.constant dense<0.000000e+00> : vector<8x128xf32>
    %17 = tpu.matmul %14, %15, %cst_16 {dimension_numbers = #tpu.dot_dimension_numbers<[1], [0], [0], [1], [0, 0, 1, 1], [], []>} : vector<8x32xf32>, vector<32x128xf32>, vector<8x128xf32> -> vector<8x128xf32>
    %18 = vector.broadcast %16 : vector<1x128xf32> to vector<8x128xf32>
    %19 = arith.addf %17, %18 : vector<8x128xf32>
    %c0_17 = arith.constant 0 : index
    %c0_18 = arith.constant 0 : index
    %20 = vector.load %arg8[%c0_17, %c0_18] : memref<8x128xf32, #tpu.memory_space<vmem>>, vector<8x128xf32>
    tpu.vector_store %arg8[%c0_17, %c0_18], %19 {strides = array<i32>} : memref<8x128xf32, #tpu.memory_space<vmem>>, vector<8x128xf32>,
    return
  }
  func.func @transform_0(%arg0: i32) -> (i32, i32) {
    %c0_i32 = arith.constant 0 : i32
    %c0_i32_0 = arith.constant 0 : i32
    %c0_i32_1 = arith.constant 0 : i32
    return %c0_i32, %c0_i32_0 : i32, i32
  }
  func.func @transform_1(%arg0: i32) -> (i32, i32) {
    %c0_i32 = arith.constant 0 : i32
    %c0_i32_0 = arith.constant 0 : i32
    %c0_i32_1 = arith.constant 0 : i32
    return %c0_i32, %c0_i32_0 : i32, i32
  }
  func.func @transform_2(%arg0: i32) -> (i32, i32) {
    %c0_i32 = arith.constant 0 : i32
    %c0_i32_0 = arith.constant 0 : i32
    %c0_i32_1 = arith.constant 0 : i32
    return %c0_i32, %c0_i32_0 : i32, i32
  }
  func.func @transform_3(%arg0: i32) -> (i32, i32) {
    %c0_i32 = arith.constant 0 : i32
    %c0_i32_0 = arith.constant 0 : i32
    %c0_i32_1 = arith.constant 0 : i32
    return %c0_i32, %c0_i32_0 : i32, i32
  }
  func.func @transform_4(%arg0: i32) -> (i32, i32) {
    %c0_i32 = arith.constant 0 : i32
    %c0_i32_0 = arith.constant 0 : i32
    %c0_i32_1 = arith.constant 0 : i32
    return %c0_i32, %c0_i32_0 : i32, i32
  }
  func.func @transform_5(%arg0: i32) -> (i32, i32) {
    %c0_i32 = arith.constant 0 : i32
    %c0_i32_0 = arith.constant 0 : i32
    %c0_i32_1 = arith.constant 0 : i32
    return %c0_i32, %c0_i32_0 : i32, i32
  }
  func.func @transform_6(%arg0: i32) -> (i32, i32) {
    %c0_i32 = arith.constant 0 : i32
    %c0_i32_0 = arith.constant 0 : i32
    %c0_i32_1 = arith.constant 0 : i32
    return %c0_i32, %c0_i32_0 : i32, i32
  }
  func.func @transform_7(%arg0: i32) -> (i32, i32) {
    %c0_i32 = arith.constant 0 : i32
    %c0_i32_0 = arith.constant 0 : i32
    %c0_i32_1 = arith.constant 0 : i32
    return %c0_i32, %c0_i32_0 : i32, i32
  }
}

</mosaic_0001>

<llo_original>
// kernel: mul.22
$region0: #{mul.22}
  %s0 = inlined_call_operand.vmem [shape: f32[2,32], index: 0, kind: input, shape index: {}]
  %s1 = inlined_call_operand.vmem [shape: f32[2,16,2], index: 1, kind: output, shape index: {}]
  $region1: #{mul.22} parent=0
    #allocation0 [shape = 'u8[4096]{0}', space=vmem, size = 0x1000, scoped, tag = 'scoped mem for input reshape']
    %s3 = sshllo.u32 0, 2
    %v4 = vld [vmem:[%s0] sm:%s3]
    %5 = vst [vmem:[#allocation0] sm:%s3] %v4
    %v6 = vld [vmem:[#allocation0] sm:$0x3]
    %vm7 = vcmask 15360
    %8 = vst.msk [vmem:[%s1] ss:$16 sm:$0x3] %vm7, %v6
    %v9 = vld [vmem:[#allocation0] sm:$0x3]
    %10 = vrot.lane.b32.xlu0 %v9, 126
    %v11 = vpop.permute.xlu0 %10
    %vm12 = vcmask 15360
    %s13 = scalar_lea.vmem %s1, 1
    %14 = vst.msk [vmem:[%s13] ss:$16 sm:$0x3] %vm12, %v11
    %v15 = vld [vmem:[#allocation0] sm:$0x3]
    %16 = vrot.lane.b32.xlu0 %v15, 124
    %v17 = vpop.permute.xlu0 %16
    %vm18 = vcmask 15360
    %s19 = scalar_lea.vmem %s1, 2
    %20 = vst.msk [vmem:[%s19] ss:$16 sm:$0x3] %vm18, %v17
    %v21 = vld [vmem:[#allocation0] sm:$0x3]
    %22 = vrot.lane.b32.xlu0 %v21, 122
    %v23 = vpop.permute.xlu0 %22
    %vm24 = vcmask 15360
    %s25 = scalar_lea.vmem %s1, 3
    %26 = vst.msk [vmem:[%s25] ss:$16 sm:$0x3] %vm24, %v23
    %v27 = vld [vmem:[#allocation0] sm:$0x3]
    %28 = vrot.lane.b32.xlu0 %v27, 120
    %v29 = vpop.permute.xlu0 %28
    %vm30 = vcmask 15360
    %s31 = scalar_lea.vmem %s1, 4
    %32 = vst.msk [vmem:[%s31] ss:$16 sm:$0x3] %vm30, %v29
    %v33 = vld [vmem:[#allocation0] sm:$0x3]
    %34 = vrot.lane.b32.xlu0 %v33, 118
    %v35 = vpop.permute.xlu0 %34
    %vm36 = vcmask 15360
    %s37 = scalar_lea.vmem %s1, 5
    %38 = vst.msk [vmem:[%s37] ss:$16 sm:$0x3] %vm36, %v35
    %v39 = vld [vmem:[#allocation0] sm:$0x3]
    %40 = vrot.lane.b32.xlu0 %v39, 116
    %v41 = vpop.permute.xlu0 %40
    %vm42 = vcmask 15360
    %s43 = scalar_lea.vmem %s1, 6
    %44 = vst.msk [vmem:[%s43] ss:$16 sm:$0x3] %vm42, %v41
    %v45 = vld [vmem:[#allocation0] sm:$0x3]
    %46 = vrot.lane.b32.xlu0 %v45, 114
    %v47 = vpop.permute.xlu0 %46
    %vm48 = vcmask 15360
    %s49 = scalar_lea.vmem %s1, 7
    %50 = vst.msk [vmem:[%s49] ss:$16 sm:$0x3] %vm48, %v47
    %v51 = vld [vmem:[#allocation0] sm:$0x3]
    %52 = vrot.lane.b32.xlu0 %v51, 112
    %v53 = vpop.permute.xlu0 %52
    %vm54 = vcmask 15360
    %s55 = scalar_lea.vmem %s1, 8
    %56 = vst.msk [vmem:[%s55] ss:$16 sm:$0x3] %vm54, %v53
    %v57 = vld [vmem:[#allocation0] sm:$0x3]
    %58 = vrot.lane.b32.xlu0 %v57, 110
    %v59 = vpop.permute.xlu0 %58
    %vm60 = vcmask 15360
    %s61 = scalar_lea.vmem %s1, 9
    %62 = vst.msk [vmem:[%s61] ss:$16 sm:$0x3] %vm60, %v59
    %v63 = vld [vmem:[#allocation0] sm:$0x3]
    %64 = vrot.lane.b32.xlu0 %v63, 108
    %v65 = vpop.permute.xlu0 %64
    %vm66 = vcmask 15360
    %s67 = scalar_lea.vmem %s1, 10
    %68 = vst.msk [vmem:[%s67] ss:$16 sm:$0x3] %vm66, %v65
    %v69 = vld [vmem:[#allocation0] sm:$0x3]
    %70 = vrot.lane.b32.xlu0 %v69, 106
    %v71 = vpop.permute.xlu0 %70
    %vm72 = vcmask 15360
    %s73 = scalar_lea.vmem %s1, 11
    %74 = vst.msk [vmem:[%s73] ss:$16 sm:$0x3] %vm72, %v71
    %v75 = vld [vmem:[#allocation0] sm:$0x3]
    %76 = vrot.lane.b32.xlu0 %v75, 104
    %v77 = vpop.permute.xlu0 %76
    %vm78 = vcmask 15360
    %s79 = scalar_lea.vmem %s1, 12
    %80 = vst.msk [vmem:[%s79] ss:$16 sm:$0x3] %vm78, %v77
    %v81 = vld [vmem:[#allocation0] sm:$0x3]
    %82 = vrot.lane.b32.xlu0 %v81, 102
    %v83 = vpop.permute.xlu0 %82
    %vm84 = vcmask 15360
    %s85 = scalar_lea.vmem %s1, 13
    %86 = vst.msk [vmem:[%s85] ss:$16 sm:$0x3] %vm84, %v83
    %v87 = vld [vmem:[#allocation0] sm:$0x3]
    %88 = vrot.lane.b32.xlu0 %v87, 100
    %v89 = vpop.permute.xlu0 %88
    %vm90 = vcmask 15360
    %s91 = scalar_lea.vmem %s1, 14
    %92 = vst.msk [vmem:[%s91] ss:$16 sm:$0x3] %vm90, %v89
    %v93 = vld [vmem:[#allocation0] sm:$0x3]
    %94 = vrot.lane.b32.xlu0 %v93, 98
    %v95 = vpop.permute.xlu0 %94
    %vm96 = vcmask 15360
    %s97 = scalar_lea.vmem %s1, 15
    %98 = vst.msk [vmem:[%s97] ss:$16 sm:$0x3] %vm96, %v95

// kernel: mul.15
$region0: #{mul.15}
  %s0 = inlined_call_operand.vmem [shape: f32[2,512], index: 0, kind: input, shape index: {}]
  %s1 = inlined_call_operand.vmem [shape: f32[2,32,16], index: 1, kind: output, shape index: {}]
  $region1: #{mul.15} parent=0
    #allocation0 [shape = 'u8[16384]{0}', space=vmem, size = 0x4000, scoped, tag = 'scoped mem for input reshape']
    %s3 = sshllo.u32 0, 2
    %s4 = smul.addr 2, 3
    %s5 = scalar_lea.vmem %s0, %s4
    %v6 = vld [vmem:[%s5] sm:%s3]
    %s7 = scalar_lea.vmem [#allocation0], 24
    %8 = vst [vmem:[%s7] sm:%s3] %v6
    %s9 = smul.addr 2, 2
    %s10 = scalar_lea.vmem %s0, %s9
    %v11 = vld [vmem:[%s10] sm:%s3]
    %s12 = scalar_lea.vmem [#allocation0], 16
    %13 = vst [vmem:[%s12] sm:%s3] %v11
    %s14 = scalar_lea.vmem %s0, 2
    %v15 = vld [vmem:[%s14] sm:%s3]
    %s16 = scalar_lea.vmem [#allocation0], 8
    %17 = vst [vmem:[%s16] sm:%s3] %v15
    %v18 = vld [vmem:[%s0] sm:%s3]
    %19 = vst [vmem:[#allocation0] sm:%s3] %v18
    %v20 = vld [vmem:[#allocation0] sm:$0x3]
    %vm21 = vcmask 130048
    %22 = vst.msk [vmem:[%s1] sm:$0x1] %vm21, %v20
    %s23 = scalar_lea.vmem %s1, 31
    %24 = vst.msk [vmem:[%s23] sm:$0x2] %vm21, %v20
    %s25 = scalar_lea.vmem [#allocation0], 8
    %v26 = vld [vmem:[%s25] sm:$0x3]
    %vm27 = vcmask 130048
    %s28 = scalar_lea.vmem %s1, 8
    %29 = vst.msk [vmem:[%s28] sm:$0x1] %vm27, %v26
    %s30 = scalar_lea.vmem %s1, 39
    %31 = vst.msk [vmem:[%s30] sm:$0x2] %vm27, %v26
    %s32 = scalar_lea.vmem [#allocation0], 16
    %v33 = vld [vmem:[%s32] sm:$0x3]
    %vm34 = vcmask 130048
    %s35 = scalar_lea.vmem %s1, 16
    %36 = vst.msk [vmem:[%s35] sm:$0x1] %vm34, %v33
    %s37 = scalar_lea.vmem %s1, 47
    %38 = vst.msk [vmem:[%s37] sm:$0x2] %vm34, %v33
    %s39 = scalar_lea.vmem [#allocation0], 24
    %v40 = vld [vmem:[%s39] sm:$0x3]
    %vm41 = vcmask 130048
    %s42 = scalar_lea.vmem %s1, 24
    %43 = vst.msk [vmem:[%s42] sm:$0x1] %vm41, %v40
    %s44 = scalar_lea.vmem %s1, 55
    %45 = vst.msk [vmem:[%s44] sm:$0x2] %vm41, %v40
    %v46 = vld [vmem:[#allocation0] ss:$8 sm:$0xf]
    %s47 = scalar_lea.vmem [#allocation0], 4294967265
    %v48 = vld [vmem:[%s47] ss:$8 sm:$0xf0]
    %vm49 = vcmask 1047556
    %v50 = vsel %vm49, %v48, %v46
    %51 = vrot.lane.b32.xlu0 %v50, 112
    %v52 = vpop.permute.xlu0 %51
    %vm53 = vcmask 130048
    %s54 = scalar_lea.vmem %s1, 1
    %55 = vst.msk [vmem:[%s54] ss:$8 sm:$0xf] %vm53, %v52
    %s56 = scalar_lea.vmem %s1, 1
    %57 = vst.msk [vmem:[%s56] ss:$8 sm:$0xf0] %vm53, %v52
    %v58 = vld [vmem:[#allocation0] ss:$8 sm:$0xf]
    %s59 = scalar_lea.vmem [#allocation0], 4294967265
    %v60 = vld [vmem:[%s59] ss:$8 sm:$0xf0]
    %vm61 = vcmask 1047556
    %v62 = vsel %vm61, %v60, %v58
    %63 = vrot.lane.b32.xlu0 %v62, 96
    %v64 = vpop.permute.xlu0 %63
    %vm65 = vcmask 130048
    %s66 = scalar_lea.vmem %s1, 2
    %67 = vst.msk [vmem:[%s66] ss:$8 sm:$0xf] %vm65, %v64
    %s68 = scalar_lea.vmem %s1, 2
    %69 = vst.msk [vmem:[%s68] ss:$8 sm:$0xf0] %vm65, %v64
    %v70 = vld [vmem:[#allocation0] ss:$8 sm:$0xf]
    %s71 = scalar_lea.vmem [#allocation0], 4294967265
    %v72 = vld [vmem:[%s71] ss:$8 sm:$0xf0]
    %vm73 = vcmask 1047556
    %v74 = vsel %vm73, %v72, %v70
    %75 = vrot.lane.b32.xlu0 %v74, 80
    %v76 = vpop.permute.xlu0 %75
    %vm77 = vcmask 130048
    %s78 = scalar_lea.vmem %s1, 3
    %79 = vst.msk [vmem:[%s78] ss:$8 sm:$0xf] %vm77, %v76
    %s80 = scalar_lea.vmem %s1, 3
    %81 = vst.msk [vmem:[%s80] ss:$8 sm:$0xf0] %vm77, %v76
    %v82 = vld [vmem:[#allocation0] ss:$8 sm:$0xf]
    %s83 = scalar_lea.vmem [#allocation0], 4294967265
    %v84 = vld [vmem:[%s83] ss:$8 sm:$0xf0]
    %vm85 = vcmask 1047556
    %v86 = vsel %vm85, %v84, %v82
    %87 = vrot.lane.b32.xlu0 %v86, 64
    %v88 = vpop.permute.xlu0 %87
    %vm89 = vcmask 130048
    %s90 = scalar_lea.vmem %s1, 4
    %91 = vst.msk [vmem:[%s90] ss:$8 sm:$0xf] %vm89, %v88
    %s92 = scalar_lea.vmem %s1, 4
    %93 = vst.msk [vmem:[%s92] ss:$8 sm:$0xf0] %vm89, %v88
    %v94 = vld [vmem:[#allocation0] ss:$8 sm:$0xf]
    %s95 = scalar_lea.vmem [#allocation0], 4294967265
    %v96 = vld [vmem:[%s95] ss:$8 sm:$0xf0]
    %vm97 = vcmask 1047556
    %v98 = vsel %vm97, %v96, %v94
    %99 = vrot.lane.b32.xlu0 %v98, 48
    %v100 = vpop.permute.xlu0 %99
    %vm101 = vcmask 130048
    %s102 = scalar_lea.vmem %s1, 5
    %103 = vst.msk [vmem:[%s102] ss:$8 sm:$0xf] %vm101, %v100
    %s104 = scalar_lea.vmem %s1, 5
    %105 = vst.msk [vmem:[%s104] ss:$8 sm:$0xf0] %vm101, %v100
    %v106 = vld [vmem:[#allocation0] ss:$8 sm:$0xf]
    %s107 = scalar_lea.vmem [#allocation0], 4294967265
    %v108 = vld [vmem:[%s107] ss:$8 sm:$0xf0]
    %vm109 = vcmask 1047556
    %v110 = vsel %vm109, %v108, %v106
    %111 = vrot.lane.b32.xlu0 %v110, 32
    %v112 = vpop.permute.xlu0 %111
    %vm113 = vcmask 130048
    %s114 = scalar_lea.vmem %s1, 6
    %115 = vst.msk [vmem:[%s114] ss:$8 sm:$0xf] %vm113, %v112
    %s116 = scalar_lea.vmem %s1, 6
    %117 = vst.msk [vmem:[%s116] ss:$8 sm:$0xf0] %vm113, %v112
    %v118 = vld [vmem:[#allocation0] ss:$8 sm:$0xf]
    %s119 = scalar_lea.vmem [#allocation0], 4294967265
    %v120 = vld [vmem:[%s119] ss:$8 sm:$0xf0]
    %vm121 = vcmask 1047556
    %v122 = vsel %vm121, %v120, %v118
    %123 = vrot.lane.b32.xlu0 %v122, 16
    %v124 = vpop.permute.xlu0 %123
    %vm125 = vcmask 130048
    %s126 = scalar_lea.vmem %s1, 7
    %127 = vst.msk [vmem:[%s126] ss:$8 sm:$0xf] %vm125, %v124
    %s128 = scalar_lea.vmem %s1, 7
    %129 = vst.msk [vmem:[%s128] ss:$8 sm:$0xf0] %vm125, %v124

// kernel: bnn_forward.1
$region0: #{bnn_forward.1}
  #allocation0 [shape = 'u32[]', space=smem, size = 0x4, offset = 0x4, fixed_abs, tag = 'smem constant byte address 0x4 - core index']
  #allocation1 [shape = 'u32[144,128]{1,0:T(1,128)}', space=vmem, size = 0x12000, scoped, tag = 'internal scratch']
  %s0 = inlined_call_operand.vmem [shape: f32[8,4], index: 0, kind: input, shape index: {}]
  %s1 = inlined_call_operand.vmem [shape: f32[4,64], index: 1, kind: input, shape index: {}]
  %s2 = inlined_call_operand.vmem [shape: f32[1,64], index: 2, kind: input, shape index: {}]
  %s3 = inlined_call_operand.vmem [shape: f32[64,32], index: 3, kind: input, shape index: {}]
  %s4 = inlined_call_operand.vmem [shape: f32[1,32], index: 4, kind: input, shape index: {}]
  %s5 = inlined_call_operand.vmem [shape: f32[32,128], index: 5, kind: input, shape index: {}]
  %s6 = inlined_call_operand.vmem [shape: f32[1,128], index: 6, kind: input, shape index: {}]
  %s7 = inlined_call_operand.vmem [shape: f32[8,128], index: 7, kind: output, shape index: {}]
  %s8 = sld [smem:[#allocation0]]
  $region38: #{bnn_forward.1} parent=0
    _
  %s10 = ssub.s32 1, %s8
  %s11 = scalar_select 0, %s10, %s8
  // Predicated region
  $region2: #{bnn_forward.1} parent=0 // pred_check
    _
  $region3: #{bnn_forward.1} parent=0 // pred_check_branch
    %13 = sbr.rel (0) target = $region5
  $region4: #{bnn_forward.1} parent=0 // pred_region
    _
  $region5: #{bnn_forward.1} parent=0 // pred_fallthru
    _
  // Predicated region
  $region6: #{bnn_forward.1} parent=0 // pred_check
    _
  $region7: #{bnn_forward.1} parent=0 // pred_check_branch
    %15 = sbr.rel (0) target = $region9
  $region8: #{bnn_forward.1} parent=0 // pred_region
    _
  $region9: #{bnn_forward.1} parent=0 // pred_fallthru
    _
  // Predicated region
  $region10: #{bnn_forward.1} parent=0 // pred_check
    _
  $region11: #{bnn_forward.1} parent=0 // pred_check_branch
    %17 = sbr.rel (0) target = $region13
  $region12: #{bnn_forward.1} parent=0 // pred_region
    _
  $region13: #{bnn_forward.1} parent=0 // pred_fallthru
    _
  // Predicated region
  $region14: #{bnn_forward.1} parent=0 // pred_check
    _
  $region15: #{bnn_forward.1} parent=0 // pred_check_branch
    %19 = sbr.rel (0) target = $region17
  $region16: #{bnn_forward.1} parent=0 // pred_region
    _
  $region17: #{bnn_forward.1} parent=0 // pred_fallthru
    _
  // Predicated region
  $region18: #{bnn_forward.1} parent=0 // pred_check
    _
  $region19: #{bnn_forward.1} parent=0 // pred_check_branch
    %21 = sbr.rel (0) target = $region21
  $region20: #{bnn_forward.1} parent=0 // pred_region
    _
  $region21: #{bnn_forward.1} parent=0 // pred_fallthru
    _
  // Predicated region
  $region22: #{bnn_forward.1} parent=0 // pred_check
    _
  $region23: #{bnn_forward.1} parent=0 // pred_check_branch
    %23 = sbr.rel (0) target = $region25
  $region24: #{bnn_forward.1} parent=0 // pred_region
    _
  $region25: #{bnn_forward.1} parent=0 // pred_fallthru
    _
  // Predicated region
  $region26: #{bnn_forward.1} parent=0 // pred_check
    _
  $region27: #{bnn_forward.1} parent=0 // pred_check_branch
    %25 = sbr.rel (0) target = $region29
  $region28: #{bnn_forward.1} parent=0 // pred_region
    _
  $region29: #{bnn_forward.1} parent=0 // pred_fallthru
    _
  %v26 = vld [vmem:[%s0] sm:$0xff]
  %v27 = vld [vmem:[%s1] sm:$0xf]
  %v28 = vld [vmem:[%s2] sm:$0x1]
  %v30 = vlaneseq
  %v31 = vshrl.u32 %v30, 7
  %v32 = vsub.s32 0, %v31
  %v33 = vrot.slane %v28, %v32
  %vm35 = vcmask 31744
  %v37 = vsel %vm35, %v26, 0
  %vm39 = vcmask 1043456
  %v41 = vsel %vm39, %v27, 0
  %43 = vmatprep.subr.mxu0 0.0
  %44 = vmatpush1.msra.mxu0 %v41
  %45 = vmatprep.subr.mxu0 0.0
  %46 = vmatpush1.msra.mxu0 0.0
  %47 = vmatprep.subr.mxu0 0.0
  %48 = vmatpush1.msra.mxu0 0.0
  %49 = vmatprep.subr.mxu0 0.0
  %50 = vmatpush1.msra.mxu0 0.0
  %51 = vmatprep.subr.mxu0 0.0
  %52 = vmatpush1.msra.mxu0 0.0
  %53 = vmatprep.subr.mxu0 0.0
  %54 = vmatpush1.msra.mxu0 0.0
  %55 = vmatprep.subr.mxu0 0.0
  %56 = vmatpush1.msra.mxu0 0.0
  %57 = vmatprep.subr.mxu0 0.0
  %58 = vmatpush1.msra.mxu0 0.0
  %59 = vmatprep.subr.mxu0 0.0
  %60 = vmatpush1.msra.mxu0 0.0
  %61 = vmatprep.subr.mxu0 0.0
  %62 = vmatpush1.msra.mxu0 0.0
  %63 = vmatprep.subr.mxu0 0.0
  %64 = vmatpush1.msra.mxu0 0.0
  %65 = vmatprep.subr.mxu0 0.0
  %66 = vmatpush1.msra.mxu0 0.0
  %67 = vmatprep.subr.mxu0 0.0
  %68 = vmatpush1.msra.mxu0 0.0
  %69 = vmatprep.subr.mxu0 0.0
  %70 = vmatpush1.msra.mxu0 0.0
  %71 = vmatprep.subr.mxu0 0.0
  %72 = vmatpush1.msra.mxu0 0.0
  %73 = vmatprep.subr.mxu0 0.0
  %74 = vmatpush1.msra.mxu0 0.0
  %75 = vmatprep.subr.mxu0 0.0
  %76 = vmatpush1.msra.mxu0 0.0
  %77 = vmatprep.subr.mxu0 0.0
  %78 = vmatpush1.msra.mxu0 0.0
  %79 = vmatprep.subr.mxu0 0.0
  %80 = vmatpush1.msra.mxu0 0.0
  %81 = vmatprep.subr.mxu0 0.0
  %82 = vmatpush1.msra.mxu0 0.0
  %83 = vmatprep.subr.mxu0 0.0
  %84 = vmatpush1.msra.mxu0 0.0
  %85 = vmatprep.subr.mxu0 0.0
  %86 = vmatpush1.msra.mxu0 0.0
  %87 = vmatprep.subr.mxu0 0.0
  %88 = vmatpush1.msra.mxu0 0.0
  %89 = vmatprep.subr.mxu0 0.0
  %90 = vmatpush1.msra.mxu0 0.0
  %91 = vmatprep.subr.mxu0 0.0
  %92 = vmatpush1.msra.mxu0 0.0
  %93 = vmatprep.subr.mxu0 0.0
  %94 = vmatpush1.msra.mxu0 0.0
  %95 = vmatprep.subr.mxu0 0.0
  %96 = vmatpush1.msra.mxu0 0.0
  %97 = vmatprep.subr.mxu0 0.0
  %98 = vmatpush1.msra.mxu0 0.0
  %99 = vmatprep.subr.mxu0 0.0
  %100 = vmatpush1.msra.mxu0 0.0
  %101 = vmatprep.subr.mxu0 0.0
  %102 = vmatpush1.msra.mxu0 0.0
  %103 = vmatprep.subr.mxu0 0.0
  %104 = vmatpush1.msra.mxu0 0.0
  %105 = vmatprep.subr.mxu0 0.0
  %106 = vmatpush1.msra.mxu0 0.0
  %107 = vmatprep.mubr.f32.mxu0 0.0
  %108 = vmatmul.mubr.f32.gmra.mrb[0].mxu0 %v37
  %v109 = vpop.f32.mrb[0].mxu0
  %v110 = vadd.f32 %v33, %v109
  %v111 = vpop.f32.mrb[0].mxu0
  %112 = vdwg.mxu0
  %v113 = vmax.f32 %v110, 0.0
  %v114 = vld [vmem:[%s3] sm:$0xff]
  %v115 = vld [vmem:[%s3 + $0x8] sm:$0xff]
  %v116 = vld [vmem:[%s3 + $0x10] sm:$0xff]
  %v117 = vld [vmem:[%s3 + $0x18] sm:$0xff]
  %v118 = vld [vmem:[%s3 + $0x20] sm:$0xff]
  %v119 = vld [vmem:[%s3 + $0x28] sm:$0xff]
  %v120 = vld [vmem:[%s3 + $0x30] sm:$0xff]
  %v121 = vld [vmem:[%s3 + $0x38] sm:$0xff]
  %v122 = vld [vmem:[%s4] sm:$0x1]
  %v124 = vlaneseq
  %v125 = vshrl.u32 %v124, 7
  %v126 = vsub.s32 0, %v125
  %v127 = vrot.slane %v122, %v126
  %vm129 = vcmask 523264
  %v131 = vsel %vm129, %v113, 0
  %133 = vmatprep.subr.mxu0 0.0
  %134 = vmatpush1.msra.mxu0 %v114
  %135 = vmatprep.subr.mxu0 0.0
  %136 = vmatpush1.msra.mxu0 %v115
  %137 = vmatprep.subr.mxu0 0.0
  %138 = vmatpush1.msra.mxu0 %v116
  %139 = vmatprep.subr.mxu0 0.0
  %140 = vmatpush1.msra.mxu0 %v117
  %141 = vmatprep.subr.mxu0 0.0
  %142 = vmatpush1.msra.mxu0 %v118
  %143 = vmatprep.subr.mxu0 0.0
  %144 = vmatpush1.msra.mxu0 %v119
  %145 = vmatprep.subr.mxu0 0.0
  %146 = vmatpush1.msra.mxu0 %v120
  %147 = vmatprep.subr.mxu0 0.0
  %148 = vmatpush1.msra.mxu0 %v121
  %149 = vmatprep.subr.mxu0 0.0
  %150 = vmatpush1.msra.mxu0 0.0
  %151 = vmatprep.subr.mxu0 0.0
  %152 = vmatpush1.msra.mxu0 0.0
  %153 = vmatprep.subr.mxu0 0.0
  %154 = vmatpush1.msra.mxu0 0.0
  %155 = vmatprep.subr.mxu0 0.0
  %156 = vmatpush1.msra.mxu0 0.0
  %157 = vmatprep.subr.mxu0 0.0
  %158 = vmatpush1.msra.mxu0 0.0
  %159 = vmatprep.subr.mxu0 0.0
  %160 = vmatpush1.msra.mxu0 0.0
  %161 = vmatprep.subr.mxu0 0.0
  %162 = vmatpush1.msra.mxu0 0.0
  %163 = vmatprep.subr.mxu0 0.0
  %164 = vmatpush1.msra.mxu0 0.0
  %165 = vmatprep.subr.mxu0 0.0
  %166 = vmatpush1.msra.mxu0 0.0
  %167 = vmatprep.subr.mxu0 0.0
  %168 = vmatpush1.msra.mxu0 0.0
  %169 = vmatprep.subr.mxu0 0.0
  %170 = vmatpush1.msra.mxu0 0.0
  %171 = vmatprep.subr.mxu0 0.0
  %172 = vmatpush1.msra.mxu0 0.0
  %173 = vmatprep.subr.mxu0 0.0
  %174 = vmatpush1.msra.mxu0 0.0
  %175 = vmatprep.subr.mxu0 0.0
  %176 = vmatpush1.msra.mxu0 0.0
  %177 = vmatprep.subr.mxu0 0.0
  %178 = vmatpush1.msra.mxu0 0.0
  %179 = vmatprep.subr.mxu0 0.0
  %180 = vmatpush1.msra.mxu0 0.0
  %181 = vmatprep.subr.mxu0 0.0
  %182 = vmatpush1.msra.mxu0 0.0
  %183 = vmatprep.subr.mxu0 0.0
  %184 = vmatpush1.msra.mxu0 0.0
  %185 = vmatprep.subr.mxu0 0.0
  %186 = vmatpush1.msra.mxu0 0.0
  %187 = vmatprep.subr.mxu0 0.0
  %188 = vmatpush1.msra.mxu0 0.0
  %189 = vmatprep.subr.mxu0 0.0
  %190 = vmatpush1.msra.mxu0 0.0
  %191 = vmatprep.subr.mxu0 0.0
  %192 = vmatpush1.msra.mxu0 0.0
  %193 = vmatprep.subr.mxu0 0.0
  %194 = vmatpush1.msra.mxu0 0.0
  %195 = vmatprep.subr.mxu0 0.0
  %196 = vmatpush1.msra.mxu0 0.0
  %197 = vmatprep.mubr.f32.mxu0 0.0
  %198 = vmatmul.mubr.f32.gmra.mrb[0].mxu0 %v131
  %v199 = vpop.f32.mrb[0].mxu0
  %v200 = vadd.f32 %v127, %v199
  %v201 = vpop.f32.mrb[0].mxu0
  %202 = vdwg.mxu0
  %v203 = vmax.f32 %v200, 0.0
  %v204 = vld [vmem:[%s5] sm:$0xff]
  %v205 = vld [vmem:[%s5 + $0x8] sm:$0xff]
  %v206 = vld [vmem:[%s5 + $0x10] sm:$0xff]
  %v207 = vld [vmem:[%s5 + $0x18] sm:$0xff]
  %v208 = vld [vmem:[%s6] sm:$0x1]
  %v210 = vlaneseq
  %v211 = vshrl.u32 %v210, 7
  %v212 = vsub.s32 0, %v211
  %v213 = vrot.slane %v208, %v212
  %vm215 = vcmask 261120
  %v217 = vsel %vm215, %v203, 0
  %219 = vmatprep.subr.mxu0 0.0
  %220 = vmatpush1.msra.mxu0 %v204
  %221 = vmatprep.subr.mxu0 0.0
  %222 = vmatpush1.msra.mxu0 %v205
  %223 = vmatprep.subr.mxu0 0.0
  %224 = vmatpush1.msra.mxu0 %v206
  %225 = vmatprep.subr.mxu0 0.0
  %226 = vmatpush1.msra.mxu0 %v207
  %227 = vmatprep.subr.mxu0 0.0
  %228 = vmatpush1.msra.mxu0 0.0
  %229 = vmatprep.subr.mxu0 0.0
  %230 = vmatpush1.msra.mxu0 0.0
  %231 = vmatprep.subr.mxu0 0.0
  %232 = vmatpush1.msra.mxu0 0.0
  %233 = vmatprep.subr.mxu0 0.0
  %234 = vmatpush1.msra.mxu0 0.0
  %235 = vmatprep.subr.mxu0 0.0
  %236 = vmatpush1.msra.mxu0 0.0
  %237 = vmatprep.subr.mxu0 0.0
  %238 = vmatpush1.msra.mxu0 0.0
  %239 = vmatprep.subr.mxu0 0.0
  %240 = vmatpush1.msra.mxu0 0.0
  %241 = vmatprep.subr.mxu0 0.0
  %242 = vmatpush1.msra.mxu0 0.0
  %243 = vmatprep.subr.mxu0 0.0
  %244 = vmatpush1.msra.mxu0 0.0
  %245 = vmatprep.subr.mxu0 0.0
  %246 = vmatpush1.msra.mxu0 0.0
  %247 = vmatprep.subr.mxu0 0.0
  %248 = vmatpush1.msra.mxu0 0.0
  %249 = vmatprep.subr.mxu0 0.0
  %250 = vmatpush1.msra.mxu0 0.0
  %251 = vmatprep.subr.mxu0 0.0
  %252 = vmatpush1.msra.mxu0 0.0
  %253 = vmatprep.subr.mxu0 0.0
  %254 = vmatpush1.msra.mxu0 0.0
  %255 = vmatprep.subr.mxu0 0.0
  %256 = vmatpush1.msra.mxu0 0.0
  %257 = vmatprep.subr.mxu0 0.0
  %258 = vmatpush1.msra.mxu0 0.0
  %259 = vmatprep.subr.mxu0 0.0
  %260 = vmatpush1.msra.mxu0 0.0
  %261 = vmatprep.subr.mxu0 0.0
  %262 = vmatpush1.msra.mxu0 0.0
  %263 = vmatprep.subr.mxu0 0.0
  %264 = vmatpush1.msra.mxu0 0.0
  %265 = vmatprep.subr.mxu0 0.0
  %266 = vmatpush1.msra.mxu0 0.0
  %267 = vmatprep.subr.mxu0 0.0
  %268 = vmatpush1.msra.mxu0 0.0
  %269 = vmatprep.subr.mxu0 0.0
  %270 = vmatpush1.msra.mxu0 0.0
  %271 = vmatprep.subr.mxu0 0.0
  %272 = vmatpush1.msra.mxu0 0.0
  %273 = vmatprep.subr.mxu0 0.0
  %274 = vmatpush1.msra.mxu0 0.0
  %275 = vmatprep.subr.mxu0 0.0
  %276 = vmatpush1.msra.mxu0 0.0
  %277 = vmatprep.subr.mxu0 0.0
  %278 = vmatpush1.msra.mxu0 0.0
  %279 = vmatprep.subr.mxu0 0.0
  %280 = vmatpush1.msra.mxu0 0.0
  %281 = vmatprep.subr.mxu0 0.0
  %282 = vmatpush1.msra.mxu0 0.0
  %283 = vmatprep.mubr.f32.mxu0 0.0
  %284 = vmatmul.mubr.f32.gmra.mrb[0].mxu0 %v217
  %v285 = vpop.f32.mrb[0].mxu0
  %v286 = vadd.f32 %v213, %v285
  %v287 = vpop.f32.mrb[0].mxu0
  %288 = vdwg.mxu0
  %289 = vst [vmem:[%s7] sm:$0xff] %v286
  // Predicated region
  $region30: #{bnn_forward.1} parent=0 // pred_check
    _
  $region31: #{bnn_forward.1} parent=0 // pred_check_branch
    %291 = sbr.rel (0) target = $region33
  $region32: #{bnn_forward.1} parent=0 // pred_region
    _
  $region33: #{bnn_forward.1} parent=0 // pred_fallthru
    _
  // Predicated region
  $region34: #{bnn_forward.1} parent=0 // pred_check
    _
  $region35: #{bnn_forward.1} parent=0 // pred_check_branch
    %293 = sbr.rel (0) target = $region37
  $region36: #{bnn_forward.1} parent=0 // pred_region
    _
  $region37: #{bnn_forward.1} parent=0 // pred_fallthru
    _

</llo_original>
